<compile_context>
chip_gen: v7x
topology: tpu7x:2x2x1
jax: 0.10.0
libtpu: 0.0.40
codegen_flags: <defaults>
</compile_context>

<pallas_src>
import jax
import jax.numpy as jnp
from jax.experimental import pallas as pl
from jax.experimental.pallas import tpu as pltpu


def _round_up(n, m):
    return (n + m - 1) // m * m


def _value_head_kernel(x_ref, w_ref, b_ref, o_ref, acc_ref):
    # x_ref: (TB, TD) native dtype   w_ref: (1, TD)   b_ref: SMEM (1,) f32
    # o_ref: (TB, 1)                 acc_ref: VMEM (TB, 1) f32
    k = pl.program_id(1)

    @pl.when(k == 0)
    def _init():
        acc_ref[...] = jnp.zeros_like(acc_ref)

    x = x_ref[...].astype(jnp.float32)          # (TB, TD)
    w = w_ref[...].astype(jnp.float32)          # (1, TD), broadcast over sublanes
    # VPU multiply + lane reduce (avoids a 1-column MXU matmul).
    acc_ref[...] += jnp.sum(x * w, axis=-1, keepdims=True)

    @pl.when(k == pl.num_programs(1) - 1)
    def _finalize():
        o_ref[...] = (acc_ref[...] + b_ref[0]).astype(o_ref.dtype)


def value_head_forward(x, weight, bias, *, block_b=None, block_d=None,
                       vmem_budget_bytes=8 * 1024 * 1024):
    """Pallas implementation of ValueHead.forward: squeeze(x @ W^T + b, -1).

    Args:
      x:      (B, D) activations (f32 or bf16; streamed in native dtype).
      weight: (1, D) — same convention as torch.nn.Linear(D, 1).weight.
      bias:   (1,)   — torch.nn.Linear(D, 1).bias.
      block_b/block_d: optional tile overrides (for testing / tuning).
    Returns:
      (B,) values with dtype == x.dtype.
    """
    B, D = x.shape
    out_dtype = x.dtype
    itemsize = x.dtype.itemsize

    # ---- tile selection (sized for the smallest scoped-VMEM generation) ----
    tb = block_b if block_b is not None else min(512, _round_up(B, 8))
    tb = _round_up(min(tb, _round_up(B, 8)), 8)

    if block_d is not None:
        td = block_d
    elif 2 * tb * D * itemsize <= vmem_budget_bytes:
        td = D                                   # whole feature dim per block
    else:
        td = max(128, (vmem_budget_bytes // (2 * tb * itemsize)) // 128 * 128)

    if td >= D:
        td = D
        d_pad = D                                # full-dim block: no 128 rule
    else:
        td = _round_up(td, 128)                  # tiled dim must be 128-aligned
        d_pad = _round_up(D, td)
    b_pad = _round_up(B, tb)

    # ---- zero-pad to full tiles (zeros contribute nothing to the dot) ------
    x_p = x
    if b_pad != B or d_pad != D:
        x_p = jnp.pad(x, ((0, b_pad - B), (0, d_pad - D)))
    w_p = weight.reshape(1, D)
    if d_pad != D:
        w_p = jnp.pad(w_p, ((0, 0), (0, d_pad - D)))
    b_scalar = bias.reshape(1).astype(jnp.float32)

    nb = b_pad // tb
    nk = d_pad // td

    out = pl.pallas_call(
        _value_head_kernel,
        out_shape=jax.ShapeDtypeStruct((b_pad, 1), out_dtype),
        grid=(nb, nk),
        in_specs=[
            pl.BlockSpec((tb, td), lambda i, k: (i, k)),          # x tile
            pl.BlockSpec((1, td), lambda i, k: (0, k)),           # weight row
            pl.BlockSpec(memory_space=pltpu.MemorySpace.SMEM),    # bias scalar
        ],
        out_specs=pl.BlockSpec((tb, 1), lambda i, k: (i, 0)),
        scratch_shapes=[pltpu.VMEM((tb, 1), jnp.float32)],
        compiler_params=pltpu.CompilerParams(
            dimension_semantics=("parallel", "arbitrary"),
        ),
    )(x_p, w_p, b_scalar)

    # torch.squeeze(out, -1): out_features == 1, drop the trailing dim.
    return out[:B, 0]
    # TODO(synk): return_normalizer is None in this setup; if supplied it
    # would be applied to the (B,) output outside the kernel.


if __name__ == "__main__":
    key = jax.random.PRNGKey(0)
    k_x, k_w, k_b, k_x2 = jax.random.split(key, 4)

    # Case 1: small shapes consistent with the module (batch=2, input_size=32).
    batch, input_size = 2, 32
    bound = 1.0 / jnp.sqrt(jnp.float32(input_size))
    weight = jax.random.uniform(k_w, (1, input_size), jnp.float32, -bound, bound)
    bias = jax.random.uniform(k_b, (1,), jnp.float32, -bound, bound)
    x = jax.random.normal(k_x, (batch, input_size), jnp.float32)

    out = jax.block_until_ready(value_head_forward(x, weight, bias))
    ref = (x @ weight.T + bias)[:, 0]
    assert out.shape == (batch,)
    assert jnp.allclose(out, ref, atol=1e-5, rtol=1e-5)

    # Case 2: ragged batch + forced feature tiling — exercises batch padding,
    # the K-reduction accumulator, and the pl.when init/finalize path.
    b2, d2 = 37, 384
    w2 = jax.random.uniform(k_w, (1, d2), jnp.float32, -0.05, 0.05)
    bias2 = jax.random.uniform(k_b, (1,), jnp.float32, -0.05, 0.05)
    x2 = jax.random.normal(k_x2, (b2, d2), jnp.float32)
    out2 = jax.block_until_ready(
        value_head_forward(x2, w2, bias2, block_b=16, block_d=128))
    ref2 = (x2 @ w2.T + bias2)[:, 0]
    assert out2.shape == (b2,)
    assert jnp.allclose(out2, ref2, atol=1e-4, rtol=1e-4)

    print("KERNEL_OK")
</pallas_src>

<mosaic_0001>
module attributes {stable_mosaic.version = 11 : i64} {
  func.func @_value_head_kernel(%arg0: i32, %arg1: i32, %arg2: memref<8x32xf32, #tpu.memory_space<vmem>>, %arg3: memref<1x32xf32, #tpu.memory_space<vmem>>, %arg4: memref<1xf32, #tpu.memory_space<smem>>, %arg5: memref<8x1xf32, #tpu.memory_space<vmem>>, %arg6: memref<8x1xf32, #tpu.memory_space<vmem>>) attributes {dimension_semantics = [#tpu.dimension_semantics<parallel>, #tpu.dimension_semantics<arbitrary>], iteration_bounds = array<i64: 1, 1>, scalar_prefetch = 0 : i64, scratch_operands = 1 : i64, tpu.core_type = #tpu.core_type<tc>, window_params = [{transform_indices = @transform_0, window_bounds = array<i64: 8, 32>}, {transform_indices = @transform_1, window_bounds = array<i64: 1, 32>}, {transform_indices = @transform_2, window_bounds = array<i64: 1>}, {transform_indices = @transform_3, window_bounds = array<i64: 8, 1>}]} {
    %c0_i32 = arith.constant 0 : i32
    %0 = arith.cmpi eq, %arg1, %c0_i32 : i32
    %1 = arith.extui %0 : i1 to i32
    %c0_i32_0 = arith.constant 0 : i32
    %2 = arith.cmpi ne, %1, %c0_i32_0 : i32
    scf.if %2 {
      %cst_10 = arith.constant 0.000000e+00 : f32
      %15 = vector.broadcast %cst_10 : f32 to vector<8x1xf32>
      %c0_11 = arith.constant 0 : index
      %c0_12 = arith.constant 0 : index
      %16 = vector.load %arg6[%c0_11, %c0_12] : memref<8x1xf32, #tpu.memory_space<vmem>>, vector<8x1xf32>
      tpu.vector_store %arg6[%c0_11, %c0_12], %15 {strides = array<i32>} : memref<8x1xf32, #tpu.memory_space<vmem>>, vector<8x1xf32>,
    } else {
    }
    %c0 = arith.constant 0 : index
    %c0_1 = arith.constant 0 : index
    %3 = vector.load %arg2[%c0, %c0_1] : memref<8x32xf32, #tpu.memory_space<vmem>>, vector<8x32xf32>
    %c0_2 = arith.constant 0 : index
    %c0_3 = arith.constant 0 : index
    %4 = vector.load %arg3[%c0_2, %c0_3] : memref<1x32xf32, #tpu.memory_space<vmem>>, vector<1x32xf32>
    %c0_4 = arith.constant 0 : index
    %c0_5 = arith.constant 0 : index
    %5 = vector.load %arg6[%c0_4, %c0_5] : memref<8x1xf32, #tpu.memory_space<vmem>>, vector<8x1xf32>
    %6 = vector.broadcast %4 : vector<1x32xf32> to vector<8x32xf32>
    %7 = arith.mulf %3, %6 : vector<8x32xf32>
    %cst = arith.constant dense<0.000000e+00> : vector<8xf32>
    %8 = vector.multi_reduction <add>, %7, %cst [1] : vector<8x32xf32> to vector<8xf32>
    %9 = vector.shape_cast %8 : vector<8xf32> to vector<8x1xf32>
    %10 = arith.addf %5, %9 : vector<8x1xf32>
    %c0_6 = arith.constant 0 : index
    %c0_7 = arith.constant 0 : index
    %11 = vector.load %arg6[%c0_6, %c0_7] : memref<8x1xf32, #tpu.memory_space<vmem>>, vector<8x1xf32>
    tpu.vector_store %arg6[%c0_6, %c0_7], %10 {strides = array<i32>} : memref<8x1xf32, #tpu.memory_space<vmem>>, vector<8x1xf32>,
    %c0_i32_8 = arith.constant 0 : i32
    %12 = arith.cmpi eq, %arg1, %c0_i32_8 : i32
    %13 = arith.extui %12 : i1 to i32
    %c0_i32_9 = arith.constant 0 : i32
    %14 = arith.cmpi ne, %13, %c0_i32_9 : i32
    scf.if %14 {
      %c0_10 = arith.constant 0 : index
      %c0_11 = arith.constant 0 : index
      %15 = vector.load %arg6[%c0_10, %c0_11] : memref<8x1xf32, #tpu.memory_space<vmem>>, vector<8x1xf32>
      %c0_12 = arith.constant 0 : index
      %16 = memref.load %arg4[%c0_12] : memref<1xf32, #tpu.memory_space<smem>>
      %17 = vector.broadcast %16 : f32 to vector<8x1xf32>
      %18 = arith.addf %15, %17 : vector<8x1xf32>
      %c0_13 = arith.constant 0 : index
      %c0_14 = arith.constant 0 : index
      %19 = vector.load %arg5[%c0_13, %c0_14] : memref<8x1xf32, #tpu.memory_space<vmem>>, vector<8x1xf32>
      tpu.vector_store %arg5[%c0_13, %c0_14], %18 {strides = array<i32>} : memref<8x1xf32, #tpu.memory_space<vmem>>, vector<8x1xf32>,
    } else {
    }
    return
  }
  func.func @transform_0(%arg0: i32, %arg1: i32) -> (i32, i32) {
    %c0_i32 = arith.constant 0 : i32
    return %arg0, %arg1 : i32, i32
  }
  func.func @transform_1(%arg0: i32, %arg1: i32) -> (i32, i32) {
    %c0_i32 = arith.constant 0 : i32
    %c0_i32_0 = arith.constant 0 : i32
    return %c0_i32, %arg1 : i32, i32
  }
  func.func @transform_2(%arg0: i32, %arg1: i32) -> i32 {
    %c0_i32 = arith.constant 0 : i32
    %c0_i32_0 = arith.constant 0 : i32
    return %c0_i32 : i32
  }
  func.func @transform_3(%arg0: i32, %arg1: i32) -> (i32, i32) {
    %c0_i32 = arith.constant 0 : i32
    %c0_i32_0 = arith.constant 0 : i32
    return %arg0, %c0_i32 : i32, i32
  }
}

</mosaic_0001>

<llo_original>
// kernel: tpu_custom_call.1
$region0: #{tpu_custom_call.1}
  #allocation0 [shape = 'u32[]', space=smem, size = 0x4, offset = 0x4, fixed_abs, tag = 'smem constant byte address 0x4 - core index']
  #allocation1 [shape = 'u32[144,128]{1,0:T(1,128)}', space=vmem, size = 0x12000, scoped, tag = 'internal scratch']
  #allocation2 [shape = 'f32[8,1]{1,0:T(8,128)}', space=vmem, size = 0x1000, scoped, tag = 'scratch operand']
  #allocation3 [shape = 'f32[1]{0:T(128)S(6)}', space=smem, size = 0x200, scoped, tag = 'scoped memory for tpu_custom_call.1']
  %s0 = inlined_call_operand.hbm [shape: f32[8,32], index: 0, kind: input, shape index: {}]
  %s1 = inlined_call_operand.vmem [shape: f32[1,32], index: 1, kind: input, shape index: {}]
  %s2 = inlined_call_operand.<no memory space> [shape: f32[1], index: 2, kind: input, shape index: {}]
  %s3 = inlined_call_operand.vmem [shape: f32[8,1], index: 3, kind: output, shape index: {}]
  %s4 = sld [smem:[#allocation0]]
  $region34: #{tpu_custom_call.1} parent=0
    _
  %s6 = ssub.s32 1, %s4
  %s7 = scalar_select 0, %s6, %s4
  %8 = sst [smem:[#allocation3]] %s2
  $region1: #{tpu_custom_call.1} parent=0
    #allocation4 [shape = 'u8[4096]{0}', space=vmem, size = 0x1000, scoped, tag = 'input window, operand 0, single buffered']
    #allocation5 [shape = 's32[1]{0}', space=sflag, size = 0x4, scoped, tag = 'scoped memory for tpu_custom_call.1']
    %9 = vsyncpa [#allocation5], 0
    // Predicated region
    $region2: #{tpu_custom_call.1} parent=1 // pred_check
      _
    $region3: #{tpu_custom_call.1} parent=1 // pred_check_branch
      %11 = sbr.rel (0) target = $region5
    $region4: #{tpu_custom_call.1} parent=1 // pred_region
      %s13 = ssub.s32 128, 128
      %14 = vsyncadd [#allocation5], %s13
      %s16 = sshll.u32 [#allocation4], 4
      %s17 = int_to_ptr.vmem [resolvable:$true] %s16
      %19 = dma.hbm_to_vmem [thread:$0]  %s0, 128, %s17, [#allocation5]
    $region5: #{tpu_custom_call.1} parent=1 // pred_fallthru
      _
    // Predicated region
    $region6: #{tpu_custom_call.1} parent=1 // pred_check
      _
    $region7: #{tpu_custom_call.1} parent=1 // pred_check_branch
      %21 = sbr.rel (0) target = $region9
    $region8: #{tpu_custom_call.1} parent=1 // pred_region
      _
    $region9: #{tpu_custom_call.1} parent=1 // pred_fallthru
      _
    // Predicated region
    $region10: #{tpu_custom_call.1} parent=1 // pred_check
      _
    $region11: #{tpu_custom_call.1} parent=1 // pred_check_branch
      %23 = sbr.rel (0) target = $region13
    $region12: #{tpu_custom_call.1} parent=1 // pred_region
      _
    $region13: #{tpu_custom_call.1} parent=1 // pred_fallthru
      _
    // Predicated region
    $region14: #{tpu_custom_call.1} parent=1 // pred_check
      _
    $region15: #{tpu_custom_call.1} parent=1 // pred_check_branch
      %25 = sbr.rel (0) target = $region17
    $region16: #{tpu_custom_call.1} parent=1 // pred_region
      %26 = dma.done [#allocation5], 128
    $region17: #{tpu_custom_call.1} parent=1 // pred_fallthru
      _
    %p27 = scmp.eq.s32.totalorder 0, 0
    // Predicated region
    $region18: #{tpu_custom_call.1} parent=1 // pred_check
      %p28 = pneg %p27
    $region19: #{tpu_custom_call.1} parent=1 // pred_check_branch
      %30 = sbr.rel (%p28) target = $region21
    $region20: #{tpu_custom_call.1} parent=1 // pred_region
      %vm31 = vcmask 7168
      %32 = vst.msk [vmem:[#allocation2] sm:$0xff] %vm31, 0.0
    $region21: #{tpu_custom_call.1} parent=1 // pred_fallthru
      _
    %v33 = vld [vmem:[#allocation4] sm:$0xff]
    %v34 = vld [vmem:[%s1] sm:$0x1]
    %v35 = vld [vmem:[#allocation2] sm:$0xff]
    %v37 = vlaneseq
    %v38 = vshrl.u32 %v37, 7
    %v39 = vsub.s32 0, %v38
    %v40 = vrot.slane %v34, %v39
    %v42 = vmul.f32 %v33, %v40
    %vm43 = vcmask 261120
    %v44 = vsel %vm43, %v42, 0.0
    %45 = vadd.xlane.f32.xlu0 %v44
    %v46 = vpop.xlane.xlu0 %45
    %v47 = vadd.f32 %v35, %v46
    %vm48 = vcmask 7168
    %49 = vst.msk [vmem:[#allocation2] sm:$0xff] %vm48, %v47
    // Predicated region
    $region22: #{tpu_custom_call.1} parent=1 // pred_check
      %p50 = pneg %p27
    $region23: #{tpu_custom_call.1} parent=1 // pred_check_branch
      %52 = sbr.rel (%p50) target = $region25
    $region24: #{tpu_custom_call.1} parent=1 // pred_region
      %v53 = vld [vmem:[#allocation2] sm:$0xff]
      %s54 = sld [smem:[#allocation3]]
      %v55 = vstv %s54
      %v56 = vadd.f32 %v53, %v55
      %57 = vst.msk [vmem:[%s3] sm:$0xff] %vm48, %v56
    $region25: #{tpu_custom_call.1} parent=1 // pred_fallthru
      _
    // Predicated region
    $region26: #{tpu_custom_call.1} parent=1 // pred_check
      _
    $region27: #{tpu_custom_call.1} parent=1 // pred_check_branch
      %59 = sbr.rel (0) target = $region29
    $region28: #{tpu_custom_call.1} parent=1 // pred_region
      _
    $region29: #{tpu_custom_call.1} parent=1 // pred_fallthru
      _
    // Predicated region
    $region30: #{tpu_custom_call.1} parent=1 // pred_check
      _
    $region31: #{tpu_custom_call.1} parent=1 // pred_check_branch
      %61 = sbr.rel (0) target = $region33
    $region32: #{tpu_custom_call.1} parent=1 // pred_region
      _
    $region33: #{tpu_custom_call.1} parent=1 // pred_fallthru
      _
    %62 = vsyncpa [#allocation5], 1

</llo_original>
